<compile_context>
chip_gen: v7x
topology: tpu7x:2x2x1
jax: 0.10.0
libtpu: 0.0.40
codegen_flags: <defaults>
</compile_context>

<pallas_src>
import functools

import jax
import jax.numpy as jnp
from jax.experimental import pallas as pl
from jax.experimental.pallas import tpu as pltpu


LANE = 128  # TPU lane width


def _round_up(n: int, m: int) -> int:
    return ((n + m - 1) // m) * m


def qnet_kernel(x_ref, w1_ref, b1_ref, w2_ref, b2_ref, out_ref):
    x = x_ref[...]             # (tile, in_size)   f32
    w1 = w1_ref[...]           # (in_size, hid_p)  f32
    tile, in_size = x.shape
    hid_p = w1.shape[1]

    if in_size <= 16:
        # fc1 on the VPU: in_size is tiny (DQN state dim, e.g. 4), so an
        # unrolled broadcast-multiply-add avoids a sub-tile contraction-dim
        # MXU matmul and is fully hidden under the activation DMA.
        h = jnp.broadcast_to(b1_ref[...], (tile, hid_p))
        for k in range(in_size):
            h = h + x[:, k:k + 1] * w1[k:k + 1, :]
    else:
        # Larger input widths: use the MXU.
        h = jnp.dot(x, w1, preferred_element_type=jnp.float32) + b1_ref[...]
    h = jnp.maximum(h, 0.0)

    # fc2 on the MXU: K = hid_p and N = out_p are 128-aligned (weights are
    # zero-padded, so padded rows/cols contribute exactly 0).
    y = jnp.dot(h, w2_ref[...], preferred_element_type=jnp.float32) + b2_ref[...]

    # Store only the logical output columns (narrow masked vst — fixed
    # per-step cost, amortized by the large batch tile).
    out_ref[...] = y[:, :out_ref.shape[1]].astype(out_ref.dtype)


def prepare_qnet_params(w1, b1, w2, b2):
    """Pad only the weight lane dims (hidden / out) to 128; keep f32.

    w1: (in, hid), b1: (hid,), w2: (hid, out), b2: (out,)  [logical]
    Returns (w1p, b1p, w2p, b2p, out_size).  Do this once, outside the loop.
    """
    in_size, hid = w1.shape
    out_size = w2.shape[1]
    hid_p = _round_up(hid, LANE)
    out_p = _round_up(out_size, LANE)

    w1p = jnp.pad(w1.astype(jnp.float32), ((0, 0), (0, hid_p - hid)))
    b1p = jnp.pad(b1.astype(jnp.float32).reshape(1, -1),
                  ((0, 0), (0, hid_p - hid)))
    w2p = jnp.pad(w2.astype(jnp.float32),
                  ((0, hid_p - hid), (0, out_p - out_size)))
    b2p = jnp.pad(b2.astype(jnp.float32).reshape(1, -1),
                  ((0, 0), (0, out_p - out_size)))
    return w1p, b1p, w2p, b2p, out_size


@functools.partial(jax.jit, static_argnames=("out_size", "tile_m"))
def qnet_forward_prepared(x, w1p, b1p, w2p, b2p, *, out_size, tile_m=1024):
    """x: (B, in_size).  Padded params from prepare_qnet_params."""
    x = x.astype(jnp.float32)           # torch.FloatTensor semantics
    B, in_size = x.shape
    hid_p = w1p.shape[1]
    out_p = w2p.shape[1]

    # Batch tile: multiple of 8 sublanes, capped at tile_m, and sized so the
    # grid has >= 2 steps for mid/large batches (lets v7x's 2 TensorCores
    # split the "parallel" axis).  For tiny batches use the full batch as a
    # single (full-dim) block.
    if B <= 8:
        tile = B
    else:
        tile = max(8, min(tile_m, _round_up(pl.cdiv(B, 2), 8)))
    grid = (pl.cdiv(B, tile),)          # ragged final block handled by Pallas

    return pl.pallas_call(
        qnet_kernel,
        out_shape=jax.ShapeDtypeStruct((B, out_size), jnp.float32),
        grid=grid,
        in_specs=[
            # Activations: streamed / double-buffered over the batch grid at
            # their logical feature width.
            pl.BlockSpec((tile, in_size), lambda i: (i, 0)),
            # Weights & biases: constant index_map -> VMEM-resident, one DMA.
            pl.BlockSpec((in_size, hid_p), lambda i: (0, 0)),
            pl.BlockSpec((1, hid_p), lambda i: (0, 0)),
            pl.BlockSpec((hid_p, out_p), lambda i: (0, 0)),
            pl.BlockSpec((1, out_p), lambda i: (0, 0)),
        ],
        # Output at its logical width: no padded writeback, no wrapper slice.
        out_specs=pl.BlockSpec((tile, out_size), lambda i: (i, 0)),
        compiler_params=pltpu.CompilerParams(
            dimension_semantics=("parallel",)),  # shards over v7x's 2 TCs
    )(x, w1p, b1p, w2p, b2p)


def qnet_forward(x, w1, b1, w2, b2):
    """Convenience wrapper taking logical-shape params (pads every call)."""
    w1p, b1p, w2p, b2p, out_size = prepare_qnet_params(w1, b1, w2, b2)
    return qnet_forward_prepared(x, w1p, b1p, w2p, b2p, out_size=out_size)


def init_qnet_params(key, input_size, hidden_size, output_size):
    """nn.Linear default init: U(-1/sqrt(fan_in), .); W stored transposed."""
    k1, k2, k3, k4 = jax.random.split(key, 4)
    bound1 = 1.0 / jnp.sqrt(jnp.float32(input_size))
    bound2 = 1.0 / jnp.sqrt(jnp.float32(hidden_size))
    w1 = jax.random.uniform(k1, (input_size, hidden_size), jnp.float32, -bound1, bound1)
    b1 = jax.random.uniform(k2, (hidden_size,), jnp.float32, -bound1, bound1)
    w2 = jax.random.uniform(k3, (hidden_size, output_size), jnp.float32, -bound2, bound2)
    b2 = jax.random.uniform(k4, (output_size,), jnp.float32, -bound2, bound2)
    return w1, b1, w2, b2


if __name__ == "__main__":
    key = jax.random.PRNGKey(0)
    k_x, k_x2, k_p = jax.random.split(key, 3)

    batch = 8
    input_size = 4      # e.g. CartPole observation dim
    hidden_size = 32
    output_size = 2     # e.g. number of discrete actions

    x = jax.random.normal(k_x, (batch, input_size), dtype=jnp.float32)
    w1, b1, w2, b2 = init_qnet_params(k_p, input_size, hidden_size, output_size)

    # One-time param prep (lane padding of the weights only).
    w1p, b1p, w2p, b2p, out_sz = prepare_qnet_params(w1, b1, w2, b2)

    out = qnet_forward_prepared(x, w1p, b1p, w2p, b2p, out_size=out_sz)
    out = jax.block_until_ready(out)
    assert out.shape == (batch, output_size)

    ref = jnp.maximum(x @ w1 + b1, 0.0) @ w2 + b2
    assert jnp.allclose(out, ref, atol=2e-2, rtol=2e-2), "mismatch (batch=8)"

    # Second small case exercising a multi-step grid with a ragged final block.
    batch2 = 20
    x2 = jax.random.normal(k_x2, (batch2, input_size), dtype=jnp.float32)
    out2 = qnet_forward_prepared(x2, w1p, b1p, w2p, b2p, out_size=out_sz)
    out2 = jax.block_until_ready(out2)
    ref2 = jnp.maximum(x2 @ w1 + b1, 0.0) @ w2 + b2
    assert out2.shape == (batch2, output_size)
    assert jnp.allclose(out2, ref2, atol=2e-2, rtol=2e-2), "mismatch (batch=20)"

    print("KERNEL_OK")
</pallas_src>

<mosaic_0001>
module attributes {stable_mosaic.version = 11 : i64} {
  func.func @qnet_kernel(%arg0: i32, %arg1: memref<8x4xf32, #tpu.memory_space<vmem>>, %arg2: memref<4x128xf32, #tpu.memory_space<vmem>>, %arg3: memref<1x128xf32, #tpu.memory_space<vmem>>, %arg4: memref<128x128xf32, #tpu.memory_space<vmem>>, %arg5: memref<1x128xf32, #tpu.memory_space<vmem>>, %arg6: memref<8x2xf32, #tpu.memory_space<vmem>>) attributes {dimension_semantics = [#tpu.dimension_semantics<parallel>], iteration_bounds = array<i64: 1>, scalar_prefetch = 0 : i64, scratch_operands = 0 : i64, tpu.core_type = #tpu.core_type<tc>, window_params = [{transform_indices = @transform_0, window_bounds = array<i64: 8, 4>}, {pipeline_mode = #tpu.pipeline_mode<synchronous>, transform_indices = @transform_1, window_bounds = array<i64: 4, 128>}, {pipeline_mode = #tpu.pipeline_mode<synchronous>, transform_indices = @transform_2, window_bounds = array<i64: 1, 128>}, {pipeline_mode = #tpu.pipeline_mode<synchronous>, transform_indices = @transform_3, window_bounds = array<i64: 128, 128>}, {pipeline_mode = #tpu.pipeline_mode<synchronous>, transform_indices = @transform_4, window_bounds = array<i64: 1, 128>}, {transform_indices = @transform_5, window_bounds = array<i64: 8, 2>}]} {
    %c0 = arith.constant 0 : index
    %c0_0 = arith.constant 0 : index
    %0 = vector.load %arg1[%c0, %c0_0] : memref<8x4xf32, #tpu.memory_space<vmem>>, vector<8x4xf32>
    %c0_1 = arith.constant 0 : index
    %c0_2 = arith.constant 0 : index
    %1 = vector.load %arg2[%c0_1, %c0_2] : memref<4x128xf32, #tpu.memory_space<vmem>>, vector<4x128xf32>
    %c0_3 = arith.constant 0 : index
    %c0_4 = arith.constant 0 : index
    %2 = vector.load %arg3[%c0_3, %c0_4] : memref<1x128xf32, #tpu.memory_space<vmem>>, vector<1x128xf32>
    %3 = vector.shape_cast %2 : vector<1x128xf32> to vector<1x128xf32>
    %4 = vector.broadcast %3 : vector<1x128xf32> to vector<8x128xf32>
    %5 = vector.extract_strided_slice %0 {offsets = [0, 0], sizes = [8, 1], strides = [1, 1]} : vector<8x4xf32> to vector<8x1xf32>
    %6 = vector.extract_strided_slice %1 {offsets = [0, 0], sizes = [1, 128], strides = [1, 1]} : vector<4x128xf32> to vector<1x128xf32>
    %7 = vector.broadcast %5 : vector<8x1xf32> to vector<8x128xf32>
    %8 = vector.broadcast %6 : vector<1x128xf32> to vector<8x128xf32>
    %9 = arith.mulf %7, %8 : vector<8x128xf32>
    %10 = arith.addf %4, %9 : vector<8x128xf32>
    %11 = vector.extract_strided_slice %0 {offsets = [0, 1], sizes = [8, 1], strides = [1, 1]} : vector<8x4xf32> to vector<8x1xf32>
    %12 = vector.extract_strided_slice %1 {offsets = [1, 0], sizes = [1, 128], strides = [1, 1]} : vector<4x128xf32> to vector<1x128xf32>
    %13 = vector.broadcast %11 : vector<8x1xf32> to vector<8x128xf32>
    %14 = vector.broadcast %12 : vector<1x128xf32> to vector<8x128xf32>
    %15 = arith.mulf %13, %14 : vector<8x128xf32>
    %16 = arith.addf %10, %15 : vector<8x128xf32>
    %17 = vector.extract_strided_slice %0 {offsets = [0, 2], sizes = [8, 1], strides = [1, 1]} : vector<8x4xf32> to vector<8x1xf32>
    %18 = vector.extract_strided_slice %1 {offsets = [2, 0], sizes = [1, 128], strides = [1, 1]} : vector<4x128xf32> to vector<1x128xf32>
    %19 = vector.broadcast %17 : vector<8x1xf32> to vector<8x128xf32>
    %20 = vector.broadcast %18 : vector<1x128xf32> to vector<8x128xf32>
    %21 = arith.mulf %19, %20 : vector<8x128xf32>
    %22 = arith.addf %16, %21 : vector<8x128xf32>
    %23 = vector.extract_strided_slice %0 {offsets = [0, 3], sizes = [8, 1], strides = [1, 1]} : vector<8x4xf32> to vector<8x1xf32>
    %24 = vector.extract_strided_slice %1 {offsets = [3, 0], sizes = [1, 128], strides = [1, 1]} : vector<4x128xf32> to vector<1x128xf32>
    %25 = vector.broadcast %23 : vector<8x1xf32> to vector<8x128xf32>
    %26 = vector.broadcast %24 : vector<1x128xf32> to vector<8x128xf32>
    %27 = arith.mulf %25, %26 : vector<8x128xf32>
    %28 = arith.addf %22, %27 : vector<8x128xf32>
    %cst = arith.constant 0.000000e+00 : f32
    %29 = vector.broadcast %cst : f32 to vector<8x128xf32>
    %30 = arith.maximumf %28, %29 : vector<8x128xf32>
    %c0_5 = arith.constant 0 : index
    %c0_6 = arith.constant 0 : index
    %31 = vector.load %arg4[%c0_5, %c0_6] : memref<128x128xf32, #tpu.memory_space<vmem>>, vector<128x128xf32>
    %cst_7 = arith.constant dense<0.000000e+00> : vector<8x128xf32>
    %32 = tpu.matmul %30, %31, %cst_7 {dimension_numbers = #tpu.dot_dimension_numbers<[1], [0], [0], [1], [0, 0, 1, 1], [], []>} : vector<8x128xf32>, vector<128x128xf32>, vector<8x128xf32> -> vector<8x128xf32>
    %c0_8 = arith.constant 0 : index
    %c0_9 = arith.constant 0 : index
    %33 = vector.load %arg5[%c0_8, %c0_9] : memref<1x128xf32, #tpu.memory_space<vmem>>, vector<1x128xf32>
    %34 = vector.broadcast %33 : vector<1x128xf32> to vector<8x128xf32>
    %35 = arith.addf %32, %34 : vector<8x128xf32>
    %36 = vector.extract_strided_slice %35 {offsets = [0, 0], sizes = [8, 2], strides = [1, 1]} : vector<8x128xf32> to vector<8x2xf32>
    %c0_10 = arith.constant 0 : index
    %c0_11 = arith.constant 0 : index
    %37 = vector.load %arg6[%c0_10, %c0_11] : memref<8x2xf32, #tpu.memory_space<vmem>>, vector<8x2xf32>
    tpu.vector_store %arg6[%c0_10, %c0_11], %36 {strides = array<i32>} : memref<8x2xf32, #tpu.memory_space<vmem>>, vector<8x2xf32>,
    return
  }
  func.func @transform_0(%arg0: i32) -> (i32, i32) {
    %c0_i32 = arith.constant 0 : i32
    %c0_i32_0 = arith.constant 0 : i32
    return %arg0, %c0_i32 : i32, i32
  }
  func.func @transform_1(%arg0: i32) -> (i32, i32) {
    %c0_i32 = arith.constant 0 : i32
    %c0_i32_0 = arith.constant 0 : i32
    %c0_i32_1 = arith.constant 0 : i32
    return %c0_i32, %c0_i32_0 : i32, i32
  }
  func.func @transform_2(%arg0: i32) -> (i32, i32) {
    %c0_i32 = arith.constant 0 : i32
    %c0_i32_0 = arith.constant 0 : i32
    %c0_i32_1 = arith.constant 0 : i32
    return %c0_i32, %c0_i32_0 : i32, i32
  }
  func.func @transform_3(%arg0: i32) -> (i32, i32) {
    %c0_i32 = arith.constant 0 : i32
    %c0_i32_0 = arith.constant 0 : i32
    %c0_i32_1 = arith.constant 0 : i32
    return %c0_i32, %c0_i32_0 : i32, i32
  }
  func.func @transform_4(%arg0: i32) -> (i32, i32) {
    %c0_i32 = arith.constant 0 : i32
    %c0_i32_0 = arith.constant 0 : i32
    %c0_i32_1 = arith.constant 0 : i32
    return %c0_i32, %c0_i32_0 : i32, i32
  }
  func.func @transform_5(%arg0: i32) -> (i32, i32) {
    %c0_i32 = arith.constant 0 : i32
    %c0_i32_0 = arith.constant 0 : i32
    return %arg0, %c0_i32 : i32, i32
  }
}

</mosaic_0001>

<llo_original>
// kernel: qnet_forward_prepared.1
$region0: #{qnet_forward_prepared.1}
  #allocation0 [shape = 'u32[]', space=smem, size = 0x4, offset = 0x4, fixed_abs, tag = 'smem constant byte address 0x4 - core index']
  #allocation1 [shape = 'u32[144,128]{1,0:T(1,128)}', space=vmem, size = 0x12000, scoped, tag = 'internal scratch']
  %s0 = inlined_call_operand.vmem [shape: f32[8,4], index: 0, kind: input, shape index: {}]
  %s1 = inlined_call_operand.vmem [shape: f32[4,128], index: 1, kind: input, shape index: {}]
  %s2 = inlined_call_operand.vmem [shape: f32[1,128], index: 2, kind: input, shape index: {}]
  %s3 = inlined_call_operand.hbm [shape: f32[128,128], index: 3, kind: input, shape index: {}]
  %s4 = inlined_call_operand.vmem [shape: f32[1,128], index: 4, kind: input, shape index: {}]
  %s5 = inlined_call_operand.vmem [shape: f32[8,2], index: 5, kind: output, shape index: {}]
  %s6 = sld [smem:[#allocation0]]
  $region34: #{qnet_forward_prepared.1} parent=0
    _
  %s8 = ssub.s32 1, %s6
  %s9 = scalar_select 0, %s8, %s6
  $region1: #{qnet_forward_prepared.1} parent=0
    #allocation2 [shape = 'u8[65536]{0}', space=vmem, size = 0x10000, scoped, tag = 'input window, operand 3, single buffered']
    #allocation3 [shape = 's32[1]{0}', space=sflag, size = 0x4, scoped, tag = 'scoped memory for qnet_forward_prepared.1']
    %10 = vsyncpa [#allocation3], 0
    // Predicated region
    $region2: #{qnet_forward_prepared.1} parent=1 // pred_check
      _
    $region3: #{qnet_forward_prepared.1} parent=1 // pred_check_branch
      %12 = sbr.rel (0) target = $region5
    $region4: #{qnet_forward_prepared.1} parent=1 // pred_region
      _
    $region5: #{qnet_forward_prepared.1} parent=1 // pred_fallthru
      _
    // Predicated region
    $region6: #{qnet_forward_prepared.1} parent=1 // pred_check
      _
    $region7: #{qnet_forward_prepared.1} parent=1 // pred_check_branch
      %14 = sbr.rel (0) target = $region9
    $region8: #{qnet_forward_prepared.1} parent=1 // pred_region
      _
    $region9: #{qnet_forward_prepared.1} parent=1 // pred_fallthru
      _
    // Predicated region
    $region10: #{qnet_forward_prepared.1} parent=1 // pred_check
      _
    $region11: #{qnet_forward_prepared.1} parent=1 // pred_check_branch
      %16 = sbr.rel (0) target = $region13
    $region12: #{qnet_forward_prepared.1} parent=1 // pred_region
      _
    $region13: #{qnet_forward_prepared.1} parent=1 // pred_fallthru
      _
    // Predicated region
    $region14: #{qnet_forward_prepared.1} parent=1 // pred_check
      _
    $region15: #{qnet_forward_prepared.1} parent=1 // pred_check_branch
      %18 = sbr.rel (0) target = $region17
    $region16: #{qnet_forward_prepared.1} parent=1 // pred_region
      %s20 = ssub.s32 2048, 2048
      %21 = vsyncadd [#allocation3], %s20
      %s22 = sshll.u32 [#allocation2], 4
      %s23 = int_to_ptr.vmem [resolvable:$true] %s22
      %28 = dma.hbm_to_vmem [thread:$0]  %s3, 2048, %s23, [#allocation3], 128, 128, 8
    $region17: #{qnet_forward_prepared.1} parent=1 // pred_fallthru
      _
    // Predicated region
    $region18: #{qnet_forward_prepared.1} parent=1 // pred_check
      _
    $region19: #{qnet_forward_prepared.1} parent=1 // pred_check_branch
      %30 = sbr.rel (0) target = $region21
    $region20: #{qnet_forward_prepared.1} parent=1 // pred_region
      _
    $region21: #{qnet_forward_prepared.1} parent=1 // pred_fallthru
      _
    // Predicated region
    $region22: #{qnet_forward_prepared.1} parent=1 // pred_check
      _
    $region23: #{qnet_forward_prepared.1} parent=1 // pred_check_branch
      %32 = sbr.rel (0) target = $region25
    $region24: #{qnet_forward_prepared.1} parent=1 // pred_region
      %33 = dma.done [#allocation3], 2048
    $region25: #{qnet_forward_prepared.1} parent=1 // pred_fallthru
      _
    %v34 = vld [vmem:[%s0] sm:$0xff]
    %v35 = vld [vmem:[%s1] sm:$0xf]
    %v36 = vld [vmem:[%s2] sm:$0x1]
    %v38 = vlaneseq
    %v39 = vshrl.u32 %v38, 7
    %v40 = vsub.s32 0, %v39
    %v41 = vrot.slane %v36, %v40
    %44 = vset.pattern.permute.xlu0 0
    %45 = vperm.xlu0 %44, %v34
    %v46 = vpop.permute.xlu0 %45
    %v48 = vlaneseq
    %v49 = vshrl.u32 %v48, 7
    %v50 = vsub.s32 0, %v49
    %v51 = vrot.slane %v35, %v50
    %v52 = vmul.f32 %v46, %v51
    %v53 = vadd.f32 %v41, %v52
    %54 = vset.pattern.permute.xlu0 1
    %55 = vperm.xlu0 %54, %v34
    %v56 = vpop.permute.xlu0 %55
    %v58 = vlaneseq
    %v59 = vshrl.u32 %v58, 7
    %v60 = vsub.s32 1, %v59
    %v61 = vrot.slane %v35, %v60
    %v62 = vmul.f32 %v56, %v61
    %v63 = vadd.f32 %v53, %v62
    %64 = vset.pattern.permute.xlu0 2
    %65 = vperm.xlu0 %64, %v34
    %v66 = vpop.permute.xlu0 %65
    %v68 = vlaneseq
    %v69 = vshrl.u32 %v68, 7
    %v70 = vsub.s32 2, %v69
    %v71 = vrot.slane %v35, %v70
    %v72 = vmul.f32 %v66, %v71
    %v73 = vadd.f32 %v63, %v72
    %74 = vset.pattern.permute.xlu0 3
    %75 = vperm.xlu0 %74, %v34
    %v76 = vpop.permute.xlu0 %75
    %v78 = vlaneseq
    %v79 = vshrl.u32 %v78, 7
    %v80 = vsub.s32 3, %v79
    %v81 = vrot.slane %v35, %v80
    %v82 = vmul.f32 %v76, %v81
    %v83 = vadd.f32 %v73, %v82
    %v84 = vmax.f32 %v83, 0.0
    %v85 = vld [vmem:[#allocation2] sm:$0xff]
    %v86 = vld [vmem:[#allocation2 + $0x8] sm:$0xff]
    %v87 = vld [vmem:[#allocation2 + $0x10] sm:$0xff]
    %v88 = vld [vmem:[#allocation2 + $0x18] sm:$0xff]
    %v89 = vld [vmem:[#allocation2 + $0x20] sm:$0xff]
    %v90 = vld [vmem:[#allocation2 + $0x28] sm:$0xff]
    %v91 = vld [vmem:[#allocation2 + $0x30] sm:$0xff]
    %v92 = vld [vmem:[#allocation2 + $0x38] sm:$0xff]
    %v93 = vld [vmem:[#allocation2 + $0x40] sm:$0xff]
    %v94 = vld [vmem:[#allocation2 + $0x48] sm:$0xff]
    %v95 = vld [vmem:[#allocation2 + $0x50] sm:$0xff]
    %v96 = vld [vmem:[#allocation2 + $0x58] sm:$0xff]
    %v97 = vld [vmem:[#allocation2 + $0x60] sm:$0xff]
    %v98 = vld [vmem:[#allocation2 + $0x68] sm:$0xff]
    %v99 = vld [vmem:[#allocation2 + $0x70] sm:$0xff]
    %v100 = vld [vmem:[#allocation2 + $0x78] sm:$0xff]
    %v101 = vld [vmem:[%s4] sm:$0x1]
    %v103 = vlaneseq
    %v104 = vshrl.u32 %v103, 7
    %v105 = vsub.s32 0, %v104
    %v106 = vrot.slane %v101, %v105
    %108 = vmatprep.subr.mxu0 0.0
    %109 = vmatpush1.msra.mxu0 %v85
    %110 = vmatprep.subr.mxu0 0.0
    %111 = vmatpush1.msra.mxu0 %v86
    %112 = vmatprep.subr.mxu0 0.0
    %113 = vmatpush1.msra.mxu0 %v87
    %114 = vmatprep.subr.mxu0 0.0
    %115 = vmatpush1.msra.mxu0 %v88
    %116 = vmatprep.subr.mxu0 0.0
    %117 = vmatpush1.msra.mxu0 %v89
    %118 = vmatprep.subr.mxu0 0.0
    %119 = vmatpush1.msra.mxu0 %v90
    %120 = vmatprep.subr.mxu0 0.0
    %121 = vmatpush1.msra.mxu0 %v91
    %122 = vmatprep.subr.mxu0 0.0
    %123 = vmatpush1.msra.mxu0 %v92
    %124 = vmatprep.subr.mxu0 0.0
    %125 = vmatpush1.msra.mxu0 %v93
    %126 = vmatprep.subr.mxu0 0.0
    %127 = vmatpush1.msra.mxu0 %v94
    %128 = vmatprep.subr.mxu0 0.0
    %129 = vmatpush1.msra.mxu0 %v95
    %130 = vmatprep.subr.mxu0 0.0
    %131 = vmatpush1.msra.mxu0 %v96
    %132 = vmatprep.subr.mxu0 0.0
    %133 = vmatpush1.msra.mxu0 %v97
    %134 = vmatprep.subr.mxu0 0.0
    %135 = vmatpush1.msra.mxu0 %v98
    %136 = vmatprep.subr.mxu0 0.0
    %137 = vmatpush1.msra.mxu0 %v99
    %138 = vmatprep.subr.mxu0 0.0
    %139 = vmatpush1.msra.mxu0 %v100
    %140 = vmatprep.subr.mxu0 0.0
    %141 = vmatpush1.msra.mxu0 0.0
    %142 = vmatprep.subr.mxu0 0.0
    %143 = vmatpush1.msra.mxu0 0.0
    %144 = vmatprep.subr.mxu0 0.0
    %145 = vmatpush1.msra.mxu0 0.0
    %146 = vmatprep.subr.mxu0 0.0
    %147 = vmatpush1.msra.mxu0 0.0
    %148 = vmatprep.subr.mxu0 0.0
    %149 = vmatpush1.msra.mxu0 0.0
    %150 = vmatprep.subr.mxu0 0.0
    %151 = vmatpush1.msra.mxu0 0.0
    %152 = vmatprep.subr.mxu0 0.0
    %153 = vmatpush1.msra.mxu0 0.0
    %154 = vmatprep.subr.mxu0 0.0
    %155 = vmatpush1.msra.mxu0 0.0
    %156 = vmatprep.subr.mxu0 0.0
    %157 = vmatpush1.msra.mxu0 0.0
    %158 = vmatprep.subr.mxu0 0.0
    %159 = vmatpush1.msra.mxu0 0.0
    %160 = vmatprep.subr.mxu0 0.0
    %161 = vmatpush1.msra.mxu0 0.0
    %162 = vmatprep.subr.mxu0 0.0
    %163 = vmatpush1.msra.mxu0 0.0
    %164 = vmatprep.subr.mxu0 0.0
    %165 = vmatpush1.msra.mxu0 0.0
    %166 = vmatprep.subr.mxu0 0.0
    %167 = vmatpush1.msra.mxu0 0.0
    %168 = vmatprep.subr.mxu0 0.0
    %169 = vmatpush1.msra.mxu0 0.0
    %170 = vmatprep.subr.mxu0 0.0
    %171 = vmatpush1.msra.mxu0 0.0
    %172 = vmatprep.mubr.f32.mxu0 0.0
    %173 = vmatmul.mubr.f32.gmra.mrb[0].mxu0 %v84
    %v174 = vpop.f32.mrb[0].mxu0
    %v175 = vadd.f32 %v106, %v174
    %v176 = vpop.f32.mrb[0].mxu0
    %177 = vdwg.mxu0
    %vm178 = vcmask 15360
    %179 = vst.msk [vmem:[%s5] sm:$0xff] %vm178, %v175
    // Predicated region
    $region26: #{qnet_forward_prepared.1} parent=1 // pred_check
      _
    $region27: #{qnet_forward_prepared.1} parent=1 // pred_check_branch
      %181 = sbr.rel (0) target = $region29
    $region28: #{qnet_forward_prepared.1} parent=1 // pred_region
      _
    $region29: #{qnet_forward_prepared.1} parent=1 // pred_fallthru
      _
    // Predicated region
    $region30: #{qnet_forward_prepared.1} parent=1 // pred_check
      _
    $region31: #{qnet_forward_prepared.1} parent=1 // pred_check_branch
      %183 = sbr.rel (0) target = $region33
    $region32: #{qnet_forward_prepared.1} parent=1 // pred_region
      _
    $region33: #{qnet_forward_prepared.1} parent=1 // pred_fallthru
      _
    %184 = vsyncpa [#allocation3], 1

</llo_original>
